<compile_context>
chip_gen: v7x
topology: tpu7x:2x2x1
jax: 0.10.0
libtpu: 0.0.40
codegen_flags: <defaults>
</compile_context>

<pallas_src>
import jax
import jax.numpy as jnp
from jax import lax
from jax.experimental import pallas as pl
from jax.experimental.pallas import tpu as pltpu

# ----------------------------- problem sizes --------------------------------
B       = 128        # batch (the module hard-codes reshape(self.batch_size=128, -1))
D_IN    = 32         # per-channel input feature width
HID     = 64         # hidden width of model_a / model_b
FEAT    = 64         # output width of model_a / model_b
CAT     = 2 * FEAT   # 128 after torch.cat(axis=1)
POOL_K  = 32         # AvgPool1d kernel size (stride = 1)
L_OUT   = CAT - POOL_K + 1   # 97
D_OUT   = 16         # model_c output width ("mean")

# packed-weight buffer row layout (all region starts 8-sublane aligned)
ROW_W1    = 0                 # rows [  0, 32) : lanes[0:64]=wa1, lanes[64:128]=wb1
ROW_B1    = 32                # row   32       : [ba1 | bb1]                 (1, 128)
ROW_WT    = 40                # rows [ 40, 56) : W_tail^T                    (16, 128)
ROW_BT    = 56                # row   56       : b_tail in lanes [0:16)
PACK_ROWS = 64                # 64 x 128 f32 = 32 KiB total


# ------------------------------ Pallas kernel -------------------------------
def ensemble_kernel(ch1_ref, ch2_ref, w_ref, out_ref):
    """out = relu([ch1|ch2] @ blkdiag(wa1,wb1) + b1) @ W_tail + b_tail,
    with the block-diagonal first layer split into two K=32 matmuls and the
    tail contracted against W_tail^T (trans_b) to avoid any zero padding."""
    f32 = jnp.float32

    w1 = w_ref[ROW_W1:ROW_W1 + D_IN, :]          # (32, 128) = [wa1 | wb1]
    b1 = w_ref[ROW_B1:ROW_B1 + 1, :]             # (1, 128)  = [ba1 | bb1]
    wt = w_ref[ROW_WT:ROW_WT + D_OUT, :]         # (16, 128) = W_tail^T
    bt = w_ref[ROW_BT:ROW_BT + 1, :][:, :D_OUT]  # (1, 16)

    h_a = jnp.dot(ch1_ref[...], w1[:, :HID], preferred_element_type=f32) + b1[:, :HID]
    h_b = jnp.dot(ch2_ref[...], w1[:, HID:], preferred_element_type=f32) + b1[:, HID:]
    h_a = jnp.maximum(h_a, 0.0)                  # (B, 64)
    h_b = jnp.maximum(h_b, 0.0)                  # (B, 64)

    # h @ W_tail == h_a @ W_tail[:64] + h_b @ W_tail[64:], done with the
    # transposed tail so the RHS contracts over its 128-wide lane dim.
    trans_b = (((1,), (1,)), ((), ()))
    out = lax.dot_general(h_a, wt[:, :HID], dimension_numbers=trans_b,
                          preferred_element_type=f32)
    out = out + lax.dot_general(h_b, wt[:, HID:], dimension_numbers=trans_b,
                                preferred_element_type=f32)
    out_ref[...] = out + bt                      # (B, 16)


def ensemble_forward(ch1, ch2, packed_w):
    # flops: 2*2*B*D_IN*HID + 2*B*CAT*D_OUT ; bytes: ch1+ch2+packed_w+out
    cost = pl.CostEstimate(flops=2 * 2 * B * D_IN * HID + 2 * B * CAT * D_OUT,
                           transcendentals=0,
                           bytes_accessed=(2 * B * D_IN + PACK_ROWS * 128 + B * D_OUT) * 4)
    return pl.pallas_call(
        ensemble_kernel,
        out_shape=jax.ShapeDtypeStruct((B, D_OUT), jnp.float32),
        in_specs=[pl.BlockSpec(memory_space=pltpu.MemorySpace.VMEM)] * 3,
        out_specs=pl.BlockSpec(memory_space=pltpu.MemorySpace.VMEM),
        cost_estimate=cost,
    )(ch1, ch2, packed_w)


# ------------------------- host-side weight folding --------------------------
def pooling_matrix():
    """P in (CAT, L_OUT): pooled = x_cat @ P reproduces AvgPool1d(32, stride=1)."""
    i = jnp.arange(CAT)[:, None]
    j = jnp.arange(L_OUT)[None, :]
    return jnp.where((i >= j) & (i < j + POOL_K), 1.0 / POOL_K, 0.0).astype(jnp.float32)


def pack_params(p):
    """Fold Linear2 -> concat -> AvgPool -> model_c (all linear) into one
    (128, 16) tail, store it transposed, and pack everything into a single
    lane-aligned (PACK_ROWS, 128) f32 buffer (one weight DMA, no zero lanes)."""
    hi = lax.Precision.HIGHEST

    # block-diagonal fusion of the two second layers (pre-concat ordering)
    w2 = jnp.zeros((2 * HID, CAT), jnp.float32)
    w2 = w2.at[:HID, :FEAT].set(p["wa2"]).at[HID:, FEAT:].set(p["wb2"])
    b2 = jnp.concatenate([p["ba2"], p["bb2"]], axis=1)                 # (1, 128)

    # fold layer-2 -> pool -> model_c into one (128, 16) tail
    pool_wc = jnp.dot(pooling_matrix(), p["wc"], precision=hi)         # (128, 16)
    w_tail = jnp.dot(w2, pool_wc, precision=hi)                        # (128, 16)
    b_tail = jnp.dot(b2, pool_wc, precision=hi) + p["bc"]              # (1, 16)

    packed = jnp.zeros((PACK_ROWS, 128), jnp.float32)
    packed = packed.at[ROW_W1:ROW_W1 + D_IN, :HID].set(p["wa1"])
    packed = packed.at[ROW_W1:ROW_W1 + D_IN, HID:].set(p["wb1"])
    packed = packed.at[ROW_B1, :HID].set(p["ba1"][0])
    packed = packed.at[ROW_B1, HID:].set(p["bb1"][0])
    packed = packed.at[ROW_WT:ROW_WT + D_OUT, :].set(w_tail.T)         # W_tail^T (16, 128)
    packed = packed.at[ROW_BT, :D_OUT].set(b_tail[0])
    return packed


# --------------------------- parameter construction -------------------------
def init_linear(key, fan_in, fan_out):
    """PyTorch-style uniform init; weight stored transposed as (in, out)."""
    kw, kb = jax.random.split(key)
    bound = 1.0 / jnp.sqrt(jnp.float32(fan_in))
    w = jax.random.uniform(kw, (fan_in, fan_out), jnp.float32, -bound, bound)
    b = jax.random.uniform(kb, (1, fan_out), jnp.float32, -bound, bound)
    return w, b


def make_params(key):
    keys = jax.random.split(key, 5)
    wa1, ba1 = init_linear(keys[0], D_IN, HID)
    wa2, ba2 = init_linear(keys[1], HID, FEAT)
    wb1, bb1 = init_linear(keys[2], D_IN, HID)
    wb2, bb2 = init_linear(keys[3], HID, FEAT)
    wc, bc = init_linear(keys[4], L_OUT, D_OUT)
    return dict(wa1=wa1, ba1=ba1, wa2=wa2, ba2=ba2,
                wb1=wb1, bb1=bb1, wb2=wb2, bb2=bb2,
                wc=wc, bc=bc)


# ------------------------------ pure-JAX reference ---------------------------
def ensemble_ref(ch1, ch2, p):
    x_a = jnp.maximum(ch1 @ p["wa1"] + p["ba1"], 0.0) @ p["wa2"] + p["ba2"]
    x_b = jnp.maximum(ch2 @ p["wb1"] + p["bb1"], 0.0) @ p["wb2"] + p["bb2"]
    x = jnp.concatenate([x_a, x_b], axis=1)
    windows = jnp.stack([x[:, k:k + L_OUT] for k in range(POOL_K)], axis=0)
    pooled = jnp.mean(windows, axis=0)
    pooled = pooled.reshape(B, -1)
    return pooled @ p["wc"] + p["bc"]


# ------------------------------------ main -----------------------------------
if __name__ == "__main__":
    key = jax.random.PRNGKey(0)
    k_ch1, k_ch2, k_par = jax.random.split(key, 3)

    ch1 = jax.random.normal(k_ch1, (B, D_IN), jnp.float32)
    ch2 = jax.random.normal(k_ch2, (B, D_IN), jnp.float32)
    params = make_params(k_par)

    packed_w = jax.block_until_ready(pack_params(params))   # host/XLA-side fold, done once

    out = ensemble_forward(ch1, ch2, packed_w)
    out = jax.block_until_ready(out)

    ref = jax.block_until_ready(ensemble_ref(ch1, ch2, params))
    assert out.shape == (B, D_OUT)
    assert jnp.allclose(out, ref, atol=2e-4, rtol=2e-4), "mismatch vs JAX reference"

    print("KERNEL_OK")
</pallas_src>

<mosaic_0001>
module attributes {stable_mosaic.version = 11 : i64} {
  func.func @ensemble_kernel(%arg0: memref<128x32xf32, #tpu.memory_space<vmem>>, %arg1: memref<128x32xf32, #tpu.memory_space<vmem>>, %arg2: memref<64x128xf32, #tpu.memory_space<vmem>>, %arg3: memref<128x16xf32, #tpu.memory_space<vmem>>) attributes {dimension_semantics = [], scalar_prefetch = 0 : i64, scratch_operands = 0 : i64, tpu.core_type = #tpu.core_type<tc>} {
    %c0 = arith.constant 0 : index
    %c0_0 = arith.constant 0 : index
    %0 = vector.load %arg2[%c0, %c0_0] : memref<64x128xf32, #tpu.memory_space<vmem>>, vector<32x128xf32>
    %c32 = arith.constant 32 : index
    %c0_1 = arith.constant 0 : index
    %1 = vector.load %arg2[%c32, %c0_1] : memref<64x128xf32, #tpu.memory_space<vmem>>, vector<1x128xf32>
    %c40 = arith.constant 40 : index
    %c0_2 = arith.constant 0 : index
    %2 = vector.load %arg2[%c40, %c0_2] : memref<64x128xf32, #tpu.memory_space<vmem>>, vector<16x128xf32>
    %c56 = arith.constant 56 : index
    %c0_3 = arith.constant 0 : index
    %3 = vector.load %arg2[%c56, %c0_3] : memref<64x128xf32, #tpu.memory_space<vmem>>, vector<1x128xf32>
    %4 = vector.extract_strided_slice %3 {offsets = [0, 0], sizes = [1, 16], strides = [1, 1]} : vector<1x128xf32> to vector<1x16xf32>
    %c0_4 = arith.constant 0 : index
    %c0_5 = arith.constant 0 : index
    %5 = vector.load %arg0[%c0_4, %c0_5] : memref<128x32xf32, #tpu.memory_space<vmem>>, vector<128x32xf32>
    %6 = vector.extract_strided_slice %0 {offsets = [0, 0], sizes = [32, 64], strides = [1, 1]} : vector<32x128xf32> to vector<32x64xf32>
    %cst = arith.constant dense<0.000000e+00> : vector<128x64xf32>
    %7 = tpu.matmul %5, %6, %cst {dimension_numbers = #tpu.dot_dimension_numbers<[1], [0], [0], [1], [0, 0, 1, 1], [], []>} : vector<128x32xf32>, vector<32x64xf32>, vector<128x64xf32> -> vector<128x64xf32>
    %8 = vector.extract_strided_slice %1 {offsets = [0, 0], sizes = [1, 64], strides = [1, 1]} : vector<1x128xf32> to vector<1x64xf32>
    %9 = vector.broadcast %8 : vector<1x64xf32> to vector<128x64xf32>
    %10 = arith.addf %7, %9 : vector<128x64xf32>
    %c0_6 = arith.constant 0 : index
    %c0_7 = arith.constant 0 : index
    %11 = vector.load %arg1[%c0_6, %c0_7] : memref<128x32xf32, #tpu.memory_space<vmem>>, vector<128x32xf32>
    %12 = vector.extract_strided_slice %0 {offsets = [0, 64], sizes = [32, 64], strides = [1, 1]} : vector<32x128xf32> to vector<32x64xf32>
    %cst_8 = arith.constant dense<0.000000e+00> : vector<128x64xf32>
    %13 = tpu.matmul %11, %12, %cst_8 {dimension_numbers = #tpu.dot_dimension_numbers<[1], [0], [0], [1], [0, 0, 1, 1], [], []>} : vector<128x32xf32>, vector<32x64xf32>, vector<128x64xf32> -> vector<128x64xf32>
    %14 = vector.extract_strided_slice %1 {offsets = [0, 64], sizes = [1, 64], strides = [1, 1]} : vector<1x128xf32> to vector<1x64xf32>
    %15 = vector.broadcast %14 : vector<1x64xf32> to vector<128x64xf32>
    %16 = arith.addf %13, %15 : vector<128x64xf32>
    %cst_9 = arith.constant 0.000000e+00 : f32
    %17 = vector.broadcast %cst_9 : f32 to vector<128x64xf32>
    %18 = arith.maximumf %10, %17 : vector<128x64xf32>
    %cst_10 = arith.constant 0.000000e+00 : f32
    %19 = vector.broadcast %cst_10 : f32 to vector<128x64xf32>
    %20 = arith.maximumf %16, %19 : vector<128x64xf32>
    %21 = vector.extract_strided_slice %2 {offsets = [0, 0], sizes = [16, 64], strides = [1, 1]} : vector<16x128xf32> to vector<16x64xf32>
    %cst_11 = arith.constant dense<0.000000e+00> : vector<128x16xf32>
    %22 = tpu.matmul %18, %21, %cst_11 {dimension_numbers = #tpu.dot_dimension_numbers<[1], [1], [0], [0], [0, 0, 1, 0], [], []>} : vector<128x64xf32>, vector<16x64xf32>, vector<128x16xf32> -> vector<128x16xf32>
    %23 = vector.extract_strided_slice %2 {offsets = [0, 64], sizes = [16, 64], strides = [1, 1]} : vector<16x128xf32> to vector<16x64xf32>
    %cst_12 = arith.constant dense<0.000000e+00> : vector<128x16xf32>
    %24 = tpu.matmul %20, %23, %cst_12 {dimension_numbers = #tpu.dot_dimension_numbers<[1], [1], [0], [0], [0, 0, 1, 0], [], []>} : vector<128x64xf32>, vector<16x64xf32>, vector<128x16xf32> -> vector<128x16xf32>
    %25 = arith.addf %22, %24 : vector<128x16xf32>
    %26 = vector.broadcast %4 : vector<1x16xf32> to vector<128x16xf32>
    %27 = arith.addf %25, %26 : vector<128x16xf32>
    %c0_13 = arith.constant 0 : index
    %c0_14 = arith.constant 0 : index
    %28 = vector.load %arg3[%c0_13, %c0_14] : memref<128x16xf32, #tpu.memory_space<vmem>>, vector<128x16xf32>
    tpu.vector_store %arg3[%c0_13, %c0_14], %27 {strides = array<i32>} : memref<128x16xf32, #tpu.memory_space<vmem>>, vector<128x16xf32>,
    return
  }
}

</mosaic_0001>

<llo_original>
// kernel: tpu_custom_call.1
$region0: #{tpu_custom_call.1}
  #allocation0 [shape = 'u32[]', space=smem, size = 0x4, offset = 0x4, fixed_abs, tag = 'smem constant byte address 0x4 - core index']
  #allocation1 [shape = 'u32[144,128]{1,0:T(1,128)}', space=vmem, size = 0x12000, scoped, tag = 'internal scratch']
  %s0 = inlined_call_operand.vmem [shape: f32[128,32], index: 0, kind: input, shape index: {}]
  %s1 = inlined_call_operand.vmem [shape: f32[128,32], index: 1, kind: input, shape index: {}]
  %s2 = inlined_call_operand.vmem [shape: f32[64,128], index: 2, kind: input, shape index: {}]
  %s3 = inlined_call_operand.vmem [shape: f32[128,16], index: 3, kind: output, shape index: {}]
  %s4 = sld [smem:[#allocation0]]
  $region22: #{tpu_custom_call.1} parent=0
    _
  %s6 = ssub.s32 1, %s4
  %s7 = scalar_select 0, %s6, %s4
  // Predicated region
  $region2: #{tpu_custom_call.1} parent=0 // pred_check
    _
  $region3: #{tpu_custom_call.1} parent=0 // pred_check_branch
    %9 = sbr.rel (0) target = $region5
  $region4: #{tpu_custom_call.1} parent=0 // pred_region
    _
  $region5: #{tpu_custom_call.1} parent=0 // pred_fallthru
    _
  // Predicated region
  $region6: #{tpu_custom_call.1} parent=0 // pred_check
    _
  $region7: #{tpu_custom_call.1} parent=0 // pred_check_branch
    %11 = sbr.rel (0) target = $region9
  $region8: #{tpu_custom_call.1} parent=0 // pred_region
    _
  $region9: #{tpu_custom_call.1} parent=0 // pred_fallthru
    _
  // Predicated region
  $region10: #{tpu_custom_call.1} parent=0 // pred_check
    _
  $region11: #{tpu_custom_call.1} parent=0 // pred_check_branch
    %13 = sbr.rel (0) target = $region13
  $region12: #{tpu_custom_call.1} parent=0 // pred_region
    _
  $region13: #{tpu_custom_call.1} parent=0 // pred_fallthru
    _
  %v14 = vld [vmem:[%s2] sm:$0xff]
  %v15 = vld [vmem:[%s2 + $0x8] sm:$0xff]
  %v16 = vld [vmem:[%s2 + $0x10] sm:$0xff]
  %v17 = vld [vmem:[%s2 + $0x18] sm:$0xff]
  %v18 = vld [vmem:[%s2 + $0x20] sm:$0x1]
  %v19 = vld [vmem:[%s2 + $0x28] sm:$0xff]
  %v20 = vld [vmem:[%s2 + $0x30] sm:$0xff]
  %v21 = vld [vmem:[%s2 + $0x38] sm:$0x1]
  %v22 = vld [vmem:[%s0] sm:$0xff]
  %v23 = vld [vmem:[%s0 + $0x8] sm:$0xff]
  %v24 = vld [vmem:[%s0 + $0x10] sm:$0xff]
  %v25 = vld [vmem:[%s0 + $0x18] sm:$0xff]
  %v26 = vld [vmem:[%s0 + $0x20] sm:$0xff]
  %v27 = vld [vmem:[%s0 + $0x28] sm:$0xff]
  %v28 = vld [vmem:[%s0 + $0x30] sm:$0xff]
  %v29 = vld [vmem:[%s0 + $0x38] sm:$0xff]
  %v30 = vld [vmem:[%s0 + $0x40] sm:$0xff]
  %v31 = vld [vmem:[%s0 + $0x48] sm:$0xff]
  %v32 = vld [vmem:[%s0 + $0x50] sm:$0xff]
  %v33 = vld [vmem:[%s0 + $0x58] sm:$0xff]
  %v34 = vld [vmem:[%s0 + $0x60] sm:$0xff]
  %v35 = vld [vmem:[%s0 + $0x68] sm:$0xff]
  %v36 = vld [vmem:[%s0 + $0x70] sm:$0xff]
  %v37 = vld [vmem:[%s0 + $0x78] sm:$0xff]
  %v38 = vlaneseq
  %v39 = vshrl.u32 %v38, 7
  %v40 = vsub.s32 0, %v39
  %v41 = vrot.slane %v18, %v40
  %vm42 = vcmask 261120
  %v44 = vsel %vm42, %v22, 0
  %v47 = vsel %vm42, %v23, 0
  %v50 = vsel %vm42, %v24, 0
  %v53 = vsel %vm42, %v25, 0
  %v56 = vsel %vm42, %v26, 0
  %v59 = vsel %vm42, %v27, 0
  %v62 = vsel %vm42, %v28, 0
  %v65 = vsel %vm42, %v29, 0
  %v68 = vsel %vm42, %v30, 0
  %v71 = vsel %vm42, %v31, 0
  %v74 = vsel %vm42, %v32, 0
  %v77 = vsel %vm42, %v33, 0
  %v80 = vsel %vm42, %v34, 0
  %v83 = vsel %vm42, %v35, 0
  %v86 = vsel %vm42, %v36, 0
  %v89 = vsel %vm42, %v37, 0
  %91 = vmatprep.subr.mxu0 0.0
  %92 = vmatpush1.msra.mxu0 %v14
  %93 = vmatprep.subr.mxu0 0.0
  %94 = vmatpush1.msra.mxu0 %v15
  %95 = vmatprep.subr.mxu0 0.0
  %96 = vmatpush1.msra.mxu0 %v16
  %97 = vmatprep.subr.mxu0 0.0
  %98 = vmatpush1.msra.mxu0 %v17
  %99 = vmatprep.subr.mxu0 0.0
  %100 = vmatpush1.msra.mxu0 0.0
  %101 = vmatprep.subr.mxu0 0.0
  %102 = vmatpush1.msra.mxu0 0.0
  %103 = vmatprep.subr.mxu0 0.0
  %104 = vmatpush1.msra.mxu0 0.0
  %105 = vmatprep.subr.mxu0 0.0
  %106 = vmatpush1.msra.mxu0 0.0
  %107 = vmatprep.subr.mxu0 0.0
  %108 = vmatpush1.msra.mxu0 0.0
  %109 = vmatprep.subr.mxu0 0.0
  %110 = vmatpush1.msra.mxu0 0.0
  %111 = vmatprep.subr.mxu0 0.0
  %112 = vmatpush1.msra.mxu0 0.0
  %113 = vmatprep.subr.mxu0 0.0
  %114 = vmatpush1.msra.mxu0 0.0
  %115 = vmatprep.subr.mxu0 0.0
  %116 = vmatpush1.msra.mxu0 0.0
  %117 = vmatprep.subr.mxu0 0.0
  %118 = vmatpush1.msra.mxu0 0.0
  %119 = vmatprep.subr.mxu0 0.0
  %120 = vmatpush1.msra.mxu0 0.0
  %121 = vmatprep.subr.mxu0 0.0
  %122 = vmatpush1.msra.mxu0 0.0
  %123 = vmatprep.subr.mxu0 0.0
  %124 = vmatpush1.msra.mxu0 0.0
  %125 = vmatprep.subr.mxu0 0.0
  %126 = vmatpush1.msra.mxu0 0.0
  %127 = vmatprep.subr.mxu0 0.0
  %128 = vmatpush1.msra.mxu0 0.0
  %129 = vmatprep.subr.mxu0 0.0
  %130 = vmatpush1.msra.mxu0 0.0
  %131 = vmatprep.subr.mxu0 0.0
  %132 = vmatpush1.msra.mxu0 0.0
  %133 = vmatprep.subr.mxu0 0.0
  %134 = vmatpush1.msra.mxu0 0.0
  %135 = vmatprep.subr.mxu0 0.0
  %136 = vmatpush1.msra.mxu0 0.0
  %137 = vmatprep.subr.mxu0 0.0
  %138 = vmatpush1.msra.mxu0 0.0
  %139 = vmatprep.subr.mxu0 0.0
  %140 = vmatpush1.msra.mxu0 0.0
  %141 = vmatprep.subr.mxu0 0.0
  %142 = vmatpush1.msra.mxu0 0.0
  %143 = vmatprep.subr.mxu0 0.0
  %144 = vmatpush1.msra.mxu0 0.0
  %145 = vmatprep.subr.mxu0 0.0
  %146 = vmatpush1.msra.mxu0 0.0
  %147 = vmatprep.subr.mxu0 0.0
  %148 = vmatpush1.msra.mxu0 0.0
  %149 = vmatprep.subr.mxu0 0.0
  %150 = vmatpush1.msra.mxu0 0.0
  %151 = vmatprep.subr.mxu0 0.0
  %152 = vmatpush1.msra.mxu0 0.0
  %153 = vmatprep.subr.mxu0 0.0
  %154 = vmatpush1.msra.mxu0 0.0
  %155 = vmatprep.mubr.f32.mxu0 0.0
  %156 = vmatmul.mubr.f32.gmra.mrb[0].mxu0 %v44
  %v157 = vpop.f32.mrb[0].mxu0
  %v158 = vadd.f32 %v41, %v157
  %v159 = vpop.f32.mrb[0].mxu0
  %160 = vmatprep.mubr.f32.mxu0 0.0
  %161 = vmatmul.mubr.f32.gmra.mrb[0].mxu0 %v47
  %v162 = vpop.f32.mrb[0].mxu0
  %v163 = vadd.f32 %v41, %v162
  %v164 = vpop.f32.mrb[0].mxu0
  %165 = vmatprep.mubr.f32.mxu0 0.0
  %166 = vmatmul.mubr.f32.gmra.mrb[0].mxu0 %v50
  %v167 = vpop.f32.mrb[0].mxu0
  %v168 = vadd.f32 %v41, %v167
  %v169 = vpop.f32.mrb[0].mxu0
  %170 = vmatprep.mubr.f32.mxu0 0.0
  %171 = vmatmul.mubr.f32.gmra.mrb[0].mxu0 %v53
  %v172 = vpop.f32.mrb[0].mxu0
  %v173 = vadd.f32 %v41, %v172
  %v174 = vpop.f32.mrb[0].mxu0
  %175 = vmatprep.mubr.f32.mxu0 0.0
  %176 = vmatmul.mubr.f32.gmra.mrb[0].mxu0 %v56
  %v177 = vpop.f32.mrb[0].mxu0
  %v178 = vadd.f32 %v41, %v177
  %v179 = vpop.f32.mrb[0].mxu0
  %180 = vmatprep.mubr.f32.mxu0 0.0
  %181 = vmatmul.mubr.f32.gmra.mrb[0].mxu0 %v59
  %v182 = vpop.f32.mrb[0].mxu0
  %v183 = vadd.f32 %v41, %v182
  %v184 = vpop.f32.mrb[0].mxu0
  %185 = vmatprep.mubr.f32.mxu0 0.0
  %186 = vmatmul.mubr.f32.gmra.mrb[0].mxu0 %v62
  %v187 = vpop.f32.mrb[0].mxu0
  %v188 = vadd.f32 %v41, %v187
  %v189 = vpop.f32.mrb[0].mxu0
  %190 = vmatprep.mubr.f32.mxu0 0.0
  %191 = vmatmul.mubr.f32.gmra.mrb[0].mxu0 %v65
  %v192 = vpop.f32.mrb[0].mxu0
  %v193 = vadd.f32 %v41, %v192
  %v194 = vpop.f32.mrb[0].mxu0
  %195 = vmatprep.mubr.f32.mxu0 0.0
  %196 = vmatmul.mubr.f32.gmra.mrb[0].mxu0 %v68
  %v197 = vpop.f32.mrb[0].mxu0
  %v198 = vadd.f32 %v41, %v197
  %v199 = vpop.f32.mrb[0].mxu0
  %200 = vmatprep.mubr.f32.mxu0 0.0
  %201 = vmatmul.mubr.f32.gmra.mrb[0].mxu0 %v71
  %v202 = vpop.f32.mrb[0].mxu0
  %v203 = vadd.f32 %v41, %v202
  %v204 = vpop.f32.mrb[0].mxu0
  %205 = vmatprep.mubr.f32.mxu0 0.0
  %206 = vmatmul.mubr.f32.gmra.mrb[0].mxu0 %v74
  %v207 = vpop.f32.mrb[0].mxu0
  %v208 = vadd.f32 %v41, %v207
  %v209 = vpop.f32.mrb[0].mxu0
  %210 = vmatprep.mubr.f32.mxu0 0.0
  %211 = vmatmul.mubr.f32.gmra.mrb[0].mxu0 %v77
  %v212 = vpop.f32.mrb[0].mxu0
  %v213 = vadd.f32 %v41, %v212
  %v214 = vpop.f32.mrb[0].mxu0
  %215 = vmatprep.mubr.f32.mxu0 0.0
  %216 = vmatmul.mubr.f32.gmra.mrb[0].mxu0 %v80
  %v217 = vpop.f32.mrb[0].mxu0
  %v218 = vadd.f32 %v41, %v217
  %v219 = vpop.f32.mrb[0].mxu0
  %220 = vmatprep.mubr.f32.mxu0 0.0
  %221 = vmatmul.mubr.f32.gmra.mrb[0].mxu0 %v83
  %v222 = vpop.f32.mrb[0].mxu0
  %v223 = vadd.f32 %v41, %v222
  %v224 = vpop.f32.mrb[0].mxu0
  %225 = vmatprep.mubr.f32.mxu0 0.0
  %226 = vmatmul.mubr.f32.gmra.mrb[0].mxu0 %v86
  %v227 = vpop.f32.mrb[0].mxu0
  %v228 = vadd.f32 %v41, %v227
  %v229 = vpop.f32.mrb[0].mxu0
  %230 = vmatprep.mubr.f32.mxu0 0.0
  %231 = vmatmul.mubr.f32.gmra.mrb[0].mxu0 %v89
  %v232 = vpop.f32.mrb[0].mxu0
  %v233 = vadd.f32 %v41, %v232
  %v234 = vpop.f32.mrb[0].mxu0
  %235 = vdwg.mxu0
  %v236 = vld [vmem:[%s1] sm:$0xff]
  %v237 = vld [vmem:[%s1 + $0x8] sm:$0xff]
  %v238 = vld [vmem:[%s1 + $0x10] sm:$0xff]
  %v239 = vld [vmem:[%s1 + $0x18] sm:$0xff]
  %v240 = vld [vmem:[%s1 + $0x20] sm:$0xff]
  %v241 = vld [vmem:[%s1 + $0x28] sm:$0xff]
  %v242 = vld [vmem:[%s1 + $0x30] sm:$0xff]
  %v243 = vld [vmem:[%s1 + $0x38] sm:$0xff]
  %v244 = vld [vmem:[%s1 + $0x40] sm:$0xff]
  %v245 = vld [vmem:[%s1 + $0x48] sm:$0xff]
  %v246 = vld [vmem:[%s1 + $0x50] sm:$0xff]
  %v247 = vld [vmem:[%s1 + $0x58] sm:$0xff]
  %v248 = vld [vmem:[%s1 + $0x60] sm:$0xff]
  %v249 = vld [vmem:[%s1 + $0x68] sm:$0xff]
  %v250 = vld [vmem:[%s1 + $0x70] sm:$0xff]
  %v251 = vld [vmem:[%s1 + $0x78] sm:$0xff]
  %256 = vrot.lane.b32.xlu0 %v14, 64
  %v257 = vpop.permute.xlu0 %256
  %258 = vrot.lane.b32.xlu0 %v15, 64
  %v259 = vpop.permute.xlu0 %258
  %260 = vrot.lane.b32.xlu0 %v16, 64
  %v261 = vpop.permute.xlu0 %260
  %262 = vrot.lane.b32.xlu0 %v17, 64
  %v263 = vpop.permute.xlu0 %262
  %269 = vrot.lane.b32.xlu0 %v41, 64
  %v270 = vpop.permute.xlu0 %269
  %v273 = vsel %vm42, %v236, 0
  %v276 = vsel %vm42, %v237, 0
  %v279 = vsel %vm42, %v238, 0
  %v282 = vsel %vm42, %v239, 0
  %v285 = vsel %vm42, %v240, 0
  %v288 = vsel %vm42, %v241, 0
  %v291 = vsel %vm42, %v242, 0
  %v294 = vsel %vm42, %v243, 0
  %v297 = vsel %vm42, %v244, 0
  %v300 = vsel %vm42, %v245, 0
  %v303 = vsel %vm42, %v246, 0
  %v306 = vsel %vm42, %v247, 0
  %v309 = vsel %vm42, %v248, 0
  %v312 = vsel %vm42, %v249, 0
  %v315 = vsel %vm42, %v250, 0
  %v318 = vsel %vm42, %v251, 0
  %320 = vmatprep.subr.mxu0 0.0
  %321 = vmatpush1.msra.mxu0 %v257
  %322 = vmatprep.subr.mxu0 0.0
  %323 = vmatpush1.msra.mxu0 %v259
  %324 = vmatprep.subr.mxu0 0.0
  %325 = vmatpush1.msra.mxu0 %v261
  %326 = vmatprep.subr.mxu0 0.0
  %327 = vmatpush1.msra.mxu0 %v263
  %328 = vmatprep.subr.mxu0 0.0
  %329 = vmatpush1.msra.mxu0 0.0
  %330 = vmatprep.subr.mxu0 0.0
  %331 = vmatpush1.msra.mxu0 0.0
  %332 = vmatprep.subr.mxu0 0.0
  %333 = vmatpush1.msra.mxu0 0.0
  %334 = vmatprep.subr.mxu0 0.0
  %335 = vmatpush1.msra.mxu0 0.0
  %336 = vmatprep.subr.mxu0 0.0
  %337 = vmatpush1.msra.mxu0 0.0
  %338 = vmatprep.subr.mxu0 0.0
  %339 = vmatpush1.msra.mxu0 0.0
  %340 = vmatprep.subr.mxu0 0.0
  %341 = vmatpush1.msra.mxu0 0.0
  %342 = vmatprep.subr.mxu0 0.0
  %343 = vmatpush1.msra.mxu0 0.0
  %344 = vmatprep.subr.mxu0 0.0
  %345 = vmatpush1.msra.mxu0 0.0
  %346 = vmatprep.subr.mxu0 0.0
  %347 = vmatpush1.msra.mxu0 0.0
  %348 = vmatprep.subr.mxu0 0.0
  %349 = vmatpush1.msra.mxu0 0.0
  %350 = vmatprep.subr.mxu0 0.0
  %351 = vmatpush1.msra.mxu0 0.0
  %352 = vmatprep.subr.mxu0 0.0
  %353 = vmatpush1.msra.mxu0 0.0
  %354 = vmatprep.subr.mxu0 0.0
  %355 = vmatpush1.msra.mxu0 0.0
  %356 = vmatprep.subr.mxu0 0.0
  %357 = vmatpush1.msra.mxu0 0.0
  %358 = vmatprep.subr.mxu0 0.0
  %359 = vmatpush1.msra.mxu0 0.0
  %360 = vmatprep.subr.mxu0 0.0
  %361 = vmatpush1.msra.mxu0 0.0
  %362 = vmatprep.subr.mxu0 0.0
  %363 = vmatpush1.msra.mxu0 0.0
  %364 = vmatprep.subr.mxu0 0.0
  %365 = vmatpush1.msra.mxu0 0.0
  %366 = vmatprep.subr.mxu0 0.0
  %367 = vmatpush1.msra.mxu0 0.0
  %368 = vmatprep.subr.mxu0 0.0
  %369 = vmatpush1.msra.mxu0 0.0
  %370 = vmatprep.subr.mxu0 0.0
  %371 = vmatpush1.msra.mxu0 0.0
  %372 = vmatprep.subr.mxu0 0.0
  %373 = vmatpush1.msra.mxu0 0.0
  %374 = vmatprep.subr.mxu0 0.0
  %375 = vmatpush1.msra.mxu0 0.0
  %376 = vmatprep.subr.mxu0 0.0
  %377 = vmatpush1.msra.mxu0 0.0
  %378 = vmatprep.subr.mxu0 0.0
  %379 = vmatpush1.msra.mxu0 0.0
  %380 = vmatprep.subr.mxu0 0.0
  %381 = vmatpush1.msra.mxu0 0.0
  %382 = vmatprep.subr.mxu0 0.0
  %383 = vmatpush1.msra.mxu0 0.0
  %384 = vmatprep.mubr.f32.mxu0 0.0
  %385 = vmatmul.mubr.f32.gmra.mrb[0].mxu0 %v273
  %v386 = vpop.f32.mrb[0].mxu0
  %v387 = vadd.f32 %v270, %v386
  %v388 = vpop.f32.mrb[0].mxu0
  %389 = vmatprep.mubr.f32.mxu0 0.0
  %390 = vmatmul.mubr.f32.gmra.mrb[0].mxu0 %v276
  %v391 = vpop.f32.mrb[0].mxu0
  %v392 = vadd.f32 %v270, %v391
  %v393 = vpop.f32.mrb[0].mxu0
  %394 = vmatprep.mubr.f32.mxu0 0.0
  %395 = vmatmul.mubr.f32.gmra.mrb[0].mxu0 %v279
  %v396 = vpop.f32.mrb[0].mxu0
  %v397 = vadd.f32 %v270, %v396
  %v398 = vpop.f32.mrb[0].mxu0
  %399 = vmatprep.mubr.f32.mxu0 0.0
  %400 = vmatmul.mubr.f32.gmra.mrb[0].mxu0 %v282
  %v401 = vpop.f32.mrb[0].mxu0
  %v402 = vadd.f32 %v270, %v401
  %v403 = vpop.f32.mrb[0].mxu0
  %404 = vmatprep.mubr.f32.mxu0 0.0
  %405 = vmatmul.mubr.f32.gmra.mrb[0].mxu0 %v285
  %v406 = vpop.f32.mrb[0].mxu0
  %v407 = vadd.f32 %v270, %v406
  %v408 = vpop.f32.mrb[0].mxu0
  %409 = vmatprep.mubr.f32.mxu0 0.0
  %410 = vmatmul.mubr.f32.gmra.mrb[0].mxu0 %v288
  %v411 = vpop.f32.mrb[0].mxu0
  %v412 = vadd.f32 %v270, %v411
  %v413 = vpop.f32.mrb[0].mxu0
  %414 = vmatprep.mubr.f32.mxu0 0.0
  %415 = vmatmul.mubr.f32.gmra.mrb[0].mxu0 %v291
  %v416 = vpop.f32.mrb[0].mxu0
  %v417 = vadd.f32 %v270, %v416
  %v418 = vpop.f32.mrb[0].mxu0
  %419 = vmatprep.mubr.f32.mxu0 0.0
  %420 = vmatmul.mubr.f32.gmra.mrb[0].mxu0 %v294
  %v421 = vpop.f32.mrb[0].mxu0
  %v422 = vadd.f32 %v270, %v421
  %v423 = vpop.f32.mrb[0].mxu0
  %424 = vmatprep.mubr.f32.mxu0 0.0
  %425 = vmatmul.mubr.f32.gmra.mrb[0].mxu0 %v297
  %v426 = vpop.f32.mrb[0].mxu0
  %v427 = vadd.f32 %v270, %v426
  %v428 = vpop.f32.mrb[0].mxu0
  %429 = vmatprep.mubr.f32.mxu0 0.0
  %430 = vmatmul.mubr.f32.gmra.mrb[0].mxu0 %v300
  %v431 = vpop.f32.mrb[0].mxu0
  %v432 = vadd.f32 %v270, %v431
  %v433 = vpop.f32.mrb[0].mxu0
  %434 = vmatprep.mubr.f32.mxu0 0.0
  %435 = vmatmul.mubr.f32.gmra.mrb[0].mxu0 %v303
  %v436 = vpop.f32.mrb[0].mxu0
  %v437 = vadd.f32 %v270, %v436
  %v438 = vpop.f32.mrb[0].mxu0
  %439 = vmatprep.mubr.f32.mxu0 0.0
  %440 = vmatmul.mubr.f32.gmra.mrb[0].mxu0 %v306
  %v441 = vpop.f32.mrb[0].mxu0
  %v442 = vadd.f32 %v270, %v441
  %v443 = vpop.f32.mrb[0].mxu0
  %444 = vmatprep.mubr.f32.mxu0 0.0
  %445 = vmatmul.mubr.f32.gmra.mrb[0].mxu0 %v309
  %v446 = vpop.f32.mrb[0].mxu0
  %v447 = vadd.f32 %v270, %v446
  %v448 = vpop.f32.mrb[0].mxu0
  %449 = vmatprep.mubr.f32.mxu0 0.0
  %450 = vmatmul.mubr.f32.gmra.mrb[0].mxu0 %v312
  %v451 = vpop.f32.mrb[0].mxu0
  %v452 = vadd.f32 %v270, %v451
  %v453 = vpop.f32.mrb[0].mxu0
  %454 = vmatprep.mubr.f32.mxu0 0.0
  %455 = vmatmul.mubr.f32.gmra.mrb[0].mxu0 %v315
  %v456 = vpop.f32.mrb[0].mxu0
  %v457 = vadd.f32 %v270, %v456
  %v458 = vpop.f32.mrb[0].mxu0
  %459 = vmatprep.mubr.f32.mxu0 0.0
  %460 = vmatmul.mubr.f32.gmra.mrb[0].mxu0 %v318
  %v461 = vpop.f32.mrb[0].mxu0
  %v462 = vadd.f32 %v270, %v461
  %v463 = vpop.f32.mrb[0].mxu0
  %464 = vdwg.mxu0
  %v465 = vmax.f32 %v158, 0.0
  %v466 = vmax.f32 %v163, 0.0
  %v467 = vmax.f32 %v168, 0.0
  %v468 = vmax.f32 %v173, 0.0
  %v469 = vmax.f32 %v178, 0.0
  %v470 = vmax.f32 %v183, 0.0
  %v471 = vmax.f32 %v188, 0.0
  %v472 = vmax.f32 %v193, 0.0
  %v473 = vmax.f32 %v198, 0.0
  %v474 = vmax.f32 %v203, 0.0
  %v475 = vmax.f32 %v208, 0.0
  %v476 = vmax.f32 %v213, 0.0
  %v477 = vmax.f32 %v218, 0.0
  %v478 = vmax.f32 %v223, 0.0
  %v479 = vmax.f32 %v228, 0.0
  %v480 = vmax.f32 %v233, 0.0
  %v481 = vmax.f32 %v387, 0.0
  %v482 = vmax.f32 %v392, 0.0
  %v483 = vmax.f32 %v397, 0.0
  %v484 = vmax.f32 %v402, 0.0
  %v485 = vmax.f32 %v407, 0.0
  %v486 = vmax.f32 %v412, 0.0
  %v487 = vmax.f32 %v417, 0.0
  %v488 = vmax.f32 %v422, 0.0
  %v489 = vmax.f32 %v427, 0.0
  %v490 = vmax.f32 %v432, 0.0
  %v491 = vmax.f32 %v437, 0.0
  %v492 = vmax.f32 %v442, 0.0
  %v493 = vmax.f32 %v447, 0.0
  %v494 = vmax.f32 %v452, 0.0
  %v495 = vmax.f32 %v457, 0.0
  %v496 = vmax.f32 %v462, 0.0
  %499 = vrot.lane.b32.xlu0 %v19, 64
  %v500 = vpop.permute.xlu0 %499
  %501 = vrot.lane.b32.xlu0 %v20, 64
  %v502 = vpop.permute.xlu0 %501
  %vm503 = vcmask 523264
  %v505 = vsel %vm503, %v481, 0
  %v508 = vsel %vm503, %v482, 0
  %v511 = vsel %vm503, %v483, 0
  %v514 = vsel %vm503, %v484, 0
  %v517 = vsel %vm503, %v485, 0
  %v520 = vsel %vm503, %v486, 0
  %v523 = vsel %vm503, %v487, 0
  %v526 = vsel %vm503, %v488, 0
  %v529 = vsel %vm503, %v489, 0
  %v532 = vsel %vm503, %v490, 0
  %v535 = vsel %vm503, %v491, 0
  %v538 = vsel %vm503, %v492, 0
  %v541 = vsel %vm503, %v493, 0
  %v544 = vsel %vm503, %v494, 0
  %v547 = vsel %vm503, %v495, 0
  %v550 = vsel %vm503, %v496, 0
  %v552 = vsel %vm503, %v500, 0
  %v554 = vsel %vm503, %v502, 0
  %556 = vmatprep.subr.mxu0 0.0
  %557 = vmatpush1.xpose.msra.mxu0 %v552
  %558 = vmatprep.subr.mxu0 0.0
  %559 = vmatpush1.xpose.msra.mxu0 %v554
  %560 = vmatprep.subr.mxu0 0.0
  %561 = vmatpush1.xpose.msra.mxu0 0.0
  %562 = vmatprep.subr.mxu0 0.0
  %563 = vmatpush1.xpose.msra.mxu0 0.0
  %564 = vmatprep.subr.mxu0 0.0
  %565 = vmatpush1.xpose.msra.mxu0 0.0
  %566 = vmatprep.subr.mxu0 0.0
  %567 = vmatpush1.xpose.msra.mxu0 0.0
  %568 = vmatprep.subr.mxu0 0.0
  %569 = vmatpush1.xpose.msra.mxu0 0.0
  %570 = vmatprep.subr.mxu0 0.0
  %571 = vmatpush1.xpose.msra.mxu0 0.0
  %572 = vmatprep.subr.mxu0 0.0
  %573 = vmatpush1.xpose.msra.mxu0 0.0
  %574 = vmatprep.subr.mxu0 0.0
  %575 = vmatpush1.xpose.msra.mxu0 0.0
  %576 = vmatprep.subr.mxu0 0.0
  %577 = vmatpush1.xpose.msra.mxu0 0.0
  %578 = vmatprep.subr.mxu0 0.0
  %579 = vmatpush1.xpose.msra.mxu0 0.0
  %580 = vmatprep.subr.mxu0 0.0
  %581 = vmatpush1.xpose.msra.mxu0 0.0
  %582 = vmatprep.subr.mxu0 0.0
  %583 = vmatpush1.xpose.msra.mxu0 0.0
  %584 = vmatprep.subr.mxu0 0.0
  %585 = vmatpush1.xpose.msra.mxu0 0.0
  %586 = vmatprep.subr.mxu0 0.0
  %587 = vmatpush1.xpose.msra.mxu0 0.0
  %588 = vmatprep.subr.mxu0 0.0
  %589 = vmatpush1.xpose.msra.mxu0 0.0
  %590 = vmatprep.subr.mxu0 0.0
  %591 = vmatpush1.xpose.msra.mxu0 0.0
  %592 = vmatprep.subr.mxu0 0.0
  %593 = vmatpush1.xpose.msra.mxu0 0.0
  %594 = vmatprep.subr.mxu0 0.0
  %595 = vmatpush1.xpose.msra.mxu0 0.0
  %596 = vmatprep.subr.mxu0 0.0
  %597 = vmatpush1.xpose.msra.mxu0 0.0
  %598 = vmatprep.subr.mxu0 0.0
  %599 = vmatpush1.xpose.msra.mxu0 0.0
  %600 = vmatprep.subr.mxu0 0.0
  %601 = vmatpush1.xpose.msra.mxu0 0.0
  %602 = vmatprep.subr.mxu0 0.0
  %603 = vmatpush1.xpose.msra.mxu0 0.0
  %604 = vmatprep.subr.mxu0 0.0
  %605 = vmatpush1.xpose.msra.mxu0 0.0
  %606 = vmatprep.subr.mxu0 0.0
  %607 = vmatpush1.xpose.msra.mxu0 0.0
  %608 = vmatprep.subr.mxu0 0.0
  %609 = vmatpush1.xpose.msra.mxu0 0.0
  %610 = vmatprep.subr.mxu0 0.0
  %611 = vmatpush1.xpose.msra.mxu0 0.0
  %612 = vmatprep.subr.mxu0 0.0
  %613 = vmatpush1.xpose.msra.mxu0 0.0
  %614 = vmatprep.subr.mxu0 0.0
  %615 = vmatpush1.xpose.msra.mxu0 0.0
  %616 = vmatprep.subr.mxu0 0.0
  %617 = vmatpush1.xpose.msra.mxu0 0.0
  %618 = vmatprep.subr.mxu0 0.0
  %619 = vmatpush1.xpose.msra.mxu0 0.0
  %620 = vmatprep.mubr.f32.mxu0 0.0
  %621 = vmatmul.mubr.f32.gmra.mrb[0].mxu0 %v505
  %v622 = vpop.f32.mrb[0].mxu0
  %v623 = vadd.f32 0.0, %v622
  %v624 = vpop.f32.mrb[0].mxu0
  %625 = vmatprep.mubr.f32.mxu0 0.0
  %626 = vmatmul.mubr.f32.gmra.mrb[0].mxu0 %v508
  %v627 = vpop.f32.mrb[0].mxu0
  %v628 = vadd.f32 0.0, %v627
  %v629 = vpop.f32.mrb[0].mxu0
  %630 = vmatprep.mubr.f32.mxu0 0.0
  %631 = vmatmul.mubr.f32.gmra.mrb[0].mxu0 %v511
  %v632 = vpop.f32.mrb[0].mxu0
  %v633 = vadd.f32 0.0, %v632
  %v634 = vpop.f32.mrb[0].mxu0
  %635 = vmatprep.mubr.f32.mxu0 0.0
  %636 = vmatmul.mubr.f32.gmra.mrb[0].mxu0 %v514
  %v637 = vpop.f32.mrb[0].mxu0
  %v638 = vadd.f32 0.0, %v637
  %v639 = vpop.f32.mrb[0].mxu0
  %640 = vmatprep.mubr.f32.mxu0 0.0
  %641 = vmatmul.mubr.f32.gmra.mrb[0].mxu0 %v517
  %v642 = vpop.f32.mrb[0].mxu0
  %v643 = vadd.f32 0.0, %v642
  %v644 = vpop.f32.mrb[0].mxu0
  %645 = vmatprep.mubr.f32.mxu0 0.0
  %646 = vmatmul.mubr.f32.gmra.mrb[0].mxu0 %v520
  %v647 = vpop.f32.mrb[0].mxu0
  %v648 = vadd.f32 0.0, %v647
  %v649 = vpop.f32.mrb[0].mxu0
  %650 = vmatprep.mubr.f32.mxu0 0.0
  %651 = vmatmul.mubr.f32.gmra.mrb[0].mxu0 %v523
  %v652 = vpop.f32.mrb[0].mxu0
  %v653 = vadd.f32 0.0, %v652
  %v654 = vpop.f32.mrb[0].mxu0
  %655 = vmatprep.mubr.f32.mxu0 0.0
  %656 = vmatmul.mubr.f32.gmra.mrb[0].mxu0 %v526
  %v657 = vpop.f32.mrb[0].mxu0
  %v658 = vadd.f32 0.0, %v657
  %v659 = vpop.f32.mrb[0].mxu0
  %660 = vmatprep.mubr.f32.mxu0 0.0
  %661 = vmatmul.mubr.f32.gmra.mrb[0].mxu0 %v529
  %v662 = vpop.f32.mrb[0].mxu0
  %v663 = vadd.f32 0.0, %v662
  %v664 = vpop.f32.mrb[0].mxu0
  %665 = vmatprep.mubr.f32.mxu0 0.0
  %666 = vmatmul.mubr.f32.gmra.mrb[0].mxu0 %v532
  %v667 = vpop.f32.mrb[0].mxu0
  %v668 = vadd.f32 0.0, %v667
  %v669 = vpop.f32.mrb[0].mxu0
  %670 = vmatprep.mubr.f32.mxu0 0.0
  %671 = vmatmul.mubr.f32.gmra.mrb[0].mxu0 %v535
  %v672 = vpop.f32.mrb[0].mxu0
  %v673 = vadd.f32 0.0, %v672
  %v674 = vpop.f32.mrb[0].mxu0
  %675 = vmatprep.mubr.f32.mxu0 0.0
  %676 = vmatmul.mubr.f32.gmra.mrb[0].mxu0 %v538
  %v677 = vpop.f32.mrb[0].mxu0
  %v678 = vadd.f32 0.0, %v677
  %v679 = vpop.f32.mrb[0].mxu0
  %680 = vmatprep.mubr.f32.mxu0 0.0
  %681 = vmatmul.mubr.f32.gmra.mrb[0].mxu0 %v541
  %v682 = vpop.f32.mrb[0].mxu0
  %v683 = vadd.f32 0.0, %v682
  %v684 = vpop.f32.mrb[0].mxu0
  %685 = vmatprep.mubr.f32.mxu0 0.0
  %686 = vmatmul.mubr.f32.gmra.mrb[0].mxu0 %v544
  %v687 = vpop.f32.mrb[0].mxu0
  %v688 = vadd.f32 0.0, %v687
  %v689 = vpop.f32.mrb[0].mxu0
  %690 = vmatprep.mubr.f32.mxu0 0.0
  %691 = vmatmul.mubr.f32.gmra.mrb[0].mxu0 %v547
  %v692 = vpop.f32.mrb[0].mxu0
  %v693 = vadd.f32 0.0, %v692
  %v694 = vpop.f32.mrb[0].mxu0
  %695 = vmatprep.mubr.f32.mxu0 0.0
  %696 = vmatmul.mubr.f32.gmra.mrb[0].mxu0 %v550
  %v697 = vpop.f32.mrb[0].mxu0
  %v698 = vadd.f32 0.0, %v697
  %v699 = vpop.f32.mrb[0].mxu0
  %700 = vdwg.mxu0
  %v702 = vsel %vm503, %v465, 0
  %v705 = vsel %vm503, %v466, 0
  %v708 = vsel %vm503, %v467, 0
  %v711 = vsel %vm503, %v468, 0
  %v714 = vsel %vm503, %v469, 0
  %v717 = vsel %vm503, %v470, 0
  %v720 = vsel %vm503, %v471, 0
  %v723 = vsel %vm503, %v472, 0
  %v726 = vsel %vm503, %v473, 0
  %v729 = vsel %vm503, %v474, 0
  %v732 = vsel %vm503, %v475, 0
  %v735 = vsel %vm503, %v476, 0
  %v738 = vsel %vm503, %v477, 0
  %v741 = vsel %vm503, %v478, 0
  %v744 = vsel %vm503, %v479, 0
  %v747 = vsel %vm503, %v480, 0
  %v749 = vsel %vm503, %v19, 0
  %v751 = vsel %vm503, %v20, 0
  %753 = vmatprep.subr.mxu0 0.0
  %754 = vmatpush1.xpose.msra.mxu0 %v749
  %755 = vmatprep.subr.mxu0 0.0
  %756 = vmatpush1.xpose.msra.mxu0 %v751
  %757 = vmatprep.subr.mxu0 0.0
  %758 = vmatpush1.xpose.msra.mxu0 0.0
  %759 = vmatprep.subr.mxu0 0.0
  %760 = vmatpush1.xpose.msra.mxu0 0.0
  %761 = vmatprep.subr.mxu0 0.0
  %762 = vmatpush1.xpose.msra.mxu0 0.0
  %763 = vmatprep.subr.mxu0 0.0
  %764 = vmatpush1.xpose.msra.mxu0 0.0
  %765 = vmatprep.subr.mxu0 0.0
  %766 = vmatpush1.xpose.msra.mxu0 0.0
  %767 = vmatprep.subr.mxu0 0.0
  %768 = vmatpush1.xpose.msra.mxu0 0.0
  %769 = vmatprep.subr.mxu0 0.0
  %770 = vmatpush1.xpose.msra.mxu0 0.0
  %771 = vmatprep.subr.mxu0 0.0
  %772 = vmatpush1.xpose.msra.mxu0 0.0
  %773 = vmatprep.subr.mxu0 0.0
  %774 = vmatpush1.xpose.msra.mxu0 0.0
  %775 = vmatprep.subr.mxu0 0.0
  %776 = vmatpush1.xpose.msra.mxu0 0.0
  %777 = vmatprep.subr.mxu0 0.0
  %778 = vmatpush1.xpose.msra.mxu0 0.0
  %779 = vmatprep.subr.mxu0 0.0
  %780 = vmatpush1.xpose.msra.mxu0 0.0
  %781 = vmatprep.subr.mxu0 0.0
  %782 = vmatpush1.xpose.msra.mxu0 0.0
  %783 = vmatprep.subr.mxu0 0.0
  %784 = vmatpush1.xpose.msra.mxu0 0.0
  %785 = vmatprep.subr.mxu0 0.0
  %786 = vmatpush1.xpose.msra.mxu0 0.0
  %787 = vmatprep.subr.mxu0 0.0
  %788 = vmatpush1.xpose.msra.mxu0 0.0
  %789 = vmatprep.subr.mxu0 0.0
  %790 = vmatpush1.xpose.msra.mxu0 0.0
  %791 = vmatprep.subr.mxu0 0.0
  %792 = vmatpush1.xpose.msra.mxu0 0.0
  %793 = vmatprep.subr.mxu0 0.0
  %794 = vmatpush1.xpose.msra.mxu0 0.0
  %795 = vmatprep.subr.mxu0 0.0
  %796 = vmatpush1.xpose.msra.mxu0 0.0
  %797 = vmatprep.subr.mxu0 0.0
  %798 = vmatpush1.xpose.msra.mxu0 0.0
  %799 = vmatprep.subr.mxu0 0.0
  %800 = vmatpush1.xpose.msra.mxu0 0.0
  %801 = vmatprep.subr.mxu0 0.0
  %802 = vmatpush1.xpose.msra.mxu0 0.0
  %803 = vmatprep.subr.mxu0 0.0
  %804 = vmatpush1.xpose.msra.mxu0 0.0
  %805 = vmatprep.subr.mxu0 0.0
  %806 = vmatpush1.xpose.msra.mxu0 0.0
  %807 = vmatprep.subr.mxu0 0.0
  %808 = vmatpush1.xpose.msra.mxu0 0.0
  %809 = vmatprep.subr.mxu0 0.0
  %810 = vmatpush1.xpose.msra.mxu0 0.0
  %811 = vmatprep.subr.mxu0 0.0
  %812 = vmatpush1.xpose.msra.mxu0 0.0
  %813 = vmatprep.subr.mxu0 0.0
  %814 = vmatpush1.xpose.msra.mxu0 0.0
  %815 = vmatprep.subr.mxu0 0.0
  %816 = vmatpush1.xpose.msra.mxu0 0.0
  %817 = vmatprep.mubr.f32.mxu0 0.0
  %818 = vmatmul.mubr.f32.gmra.mrb[0].mxu0 %v702
  %v819 = vpop.f32.mrb[0].mxu0
  %v820 = vadd.f32 %v623, %v819
  %v821 = vpop.f32.mrb[0].mxu0
  %822 = vmatprep.mubr.f32.mxu0 0.0
  %823 = vmatmul.mubr.f32.gmra.mrb[0].mxu0 %v705
  %v824 = vpop.f32.mrb[0].mxu0
  %v825 = vadd.f32 %v628, %v824
  %v826 = vpop.f32.mrb[0].mxu0
  %827 = vmatprep.mubr.f32.mxu0 0.0
  %828 = vmatmul.mubr.f32.gmra.mrb[0].mxu0 %v708
  %v829 = vpop.f32.mrb[0].mxu0
  %v830 = vadd.f32 %v633, %v829
  %v831 = vpop.f32.mrb[0].mxu0
  %832 = vmatprep.mubr.f32.mxu0 0.0
  %833 = vmatmul.mubr.f32.gmra.mrb[0].mxu0 %v711
  %v834 = vpop.f32.mrb[0].mxu0
  %v835 = vadd.f32 %v638, %v834
  %v836 = vpop.f32.mrb[0].mxu0
  %837 = vmatprep.mubr.f32.mxu0 0.0
  %838 = vmatmul.mubr.f32.gmra.mrb[0].mxu0 %v714
  %v839 = vpop.f32.mrb[0].mxu0
  %v840 = vadd.f32 %v643, %v839
  %v841 = vpop.f32.mrb[0].mxu0
  %842 = vmatprep.mubr.f32.mxu0 0.0
  %843 = vmatmul.mubr.f32.gmra.mrb[0].mxu0 %v717
  %v844 = vpop.f32.mrb[0].mxu0
  %v845 = vadd.f32 %v648, %v844
  %v846 = vpop.f32.mrb[0].mxu0
  %847 = vmatprep.mubr.f32.mxu0 0.0
  %848 = vmatmul.mubr.f32.gmra.mrb[0].mxu0 %v720
  %v849 = vpop.f32.mrb[0].mxu0
  %v850 = vadd.f32 %v653, %v849
  %v851 = vpop.f32.mrb[0].mxu0
  %852 = vmatprep.mubr.f32.mxu0 0.0
  %853 = vmatmul.mubr.f32.gmra.mrb[0].mxu0 %v723
  %v854 = vpop.f32.mrb[0].mxu0
  %v855 = vadd.f32 %v658, %v854
  %v856 = vpop.f32.mrb[0].mxu0
  %857 = vmatprep.mubr.f32.mxu0 0.0
  %858 = vmatmul.mubr.f32.gmra.mrb[0].mxu0 %v726
  %v859 = vpop.f32.mrb[0].mxu0
  %v860 = vadd.f32 %v663, %v859
  %v861 = vpop.f32.mrb[0].mxu0
  %862 = vmatprep.mubr.f32.mxu0 0.0
  %863 = vmatmul.mubr.f32.gmra.mrb[0].mxu0 %v729
  %v864 = vpop.f32.mrb[0].mxu0
  %v865 = vadd.f32 %v668, %v864
  %v866 = vpop.f32.mrb[0].mxu0
  %867 = vmatprep.mubr.f32.mxu0 0.0
  %868 = vmatmul.mubr.f32.gmra.mrb[0].mxu0 %v732
  %v869 = vpop.f32.mrb[0].mxu0
  %v870 = vadd.f32 %v673, %v869
  %v871 = vpop.f32.mrb[0].mxu0
  %872 = vmatprep.mubr.f32.mxu0 0.0
  %873 = vmatmul.mubr.f32.gmra.mrb[0].mxu0 %v735
  %v874 = vpop.f32.mrb[0].mxu0
  %v875 = vadd.f32 %v678, %v874
  %v876 = vpop.f32.mrb[0].mxu0
  %877 = vmatprep.mubr.f32.mxu0 0.0
  %878 = vmatmul.mubr.f32.gmra.mrb[0].mxu0 %v738
  %v879 = vpop.f32.mrb[0].mxu0
  %v880 = vadd.f32 %v683, %v879
  %v881 = vpop.f32.mrb[0].mxu0
  %882 = vmatprep.mubr.f32.mxu0 0.0
  %883 = vmatmul.mubr.f32.gmra.mrb[0].mxu0 %v741
  %v884 = vpop.f32.mrb[0].mxu0
  %v885 = vadd.f32 %v688, %v884
  %v886 = vpop.f32.mrb[0].mxu0
  %887 = vmatprep.mubr.f32.mxu0 0.0
  %888 = vmatmul.mubr.f32.gmra.mrb[0].mxu0 %v744
  %v889 = vpop.f32.mrb[0].mxu0
  %v890 = vadd.f32 %v693, %v889
  %v891 = vpop.f32.mrb[0].mxu0
  %892 = vmatprep.mubr.f32.mxu0 0.0
  %893 = vmatmul.mubr.f32.gmra.mrb[0].mxu0 %v747
  %v894 = vpop.f32.mrb[0].mxu0
  %v895 = vadd.f32 %v698, %v894
  %v896 = vpop.f32.mrb[0].mxu0
  %897 = vdwg.mxu0
  %v898 = vlaneseq
  %v899 = vshrl.u32 %v898, 7
  %v900 = vsub.s32 0, %v899
  %v901 = vrot.slane %v21, %v900
  %v902 = vadd.f32 %v820, %v901
  %v903 = vadd.f32 %v825, %v901
  %v904 = vadd.f32 %v830, %v901
  %v905 = vadd.f32 %v835, %v901
  %v906 = vadd.f32 %v840, %v901
  %v907 = vadd.f32 %v845, %v901
  %v908 = vadd.f32 %v850, %v901
  %v909 = vadd.f32 %v855, %v901
  %v910 = vadd.f32 %v860, %v901
  %v911 = vadd.f32 %v865, %v901
  %v912 = vadd.f32 %v870, %v901
  %v913 = vadd.f32 %v875, %v901
  %v914 = vadd.f32 %v880, %v901
  %v915 = vadd.f32 %v885, %v901
  %v916 = vadd.f32 %v890, %v901
  %v917 = vadd.f32 %v895, %v901
  %vm918 = vcmask 130048
  %919 = vst.msk [vmem:[%s3] sm:$0xff] %vm918, %v902
  %920 = vst.msk [vmem:[%s3 + $0x8] sm:$0xff] %vm918, %v903
  %921 = vst.msk [vmem:[%s3 + $0x10] sm:$0xff] %vm918, %v904
  %922 = vst.msk [vmem:[%s3 + $0x18] sm:$0xff] %vm918, %v905
  %923 = vst.msk [vmem:[%s3 + $0x20] sm:$0xff] %vm918, %v906
  %924 = vst.msk [vmem:[%s3 + $0x28] sm:$0xff] %vm918, %v907
  %925 = vst.msk [vmem:[%s3 + $0x30] sm:$0xff] %vm918, %v908
  %926 = vst.msk [vmem:[%s3 + $0x38] sm:$0xff] %vm918, %v909
  %927 = vst.msk [vmem:[%s3 + $0x40] sm:$0xff] %vm918, %v910
  %928 = vst.msk [vmem:[%s3 + $0x48] sm:$0xff] %vm918, %v911
  %929 = vst.msk [vmem:[%s3 + $0x50] sm:$0xff] %vm918, %v912
  %930 = vst.msk [vmem:[%s3 + $0x58] sm:$0xff] %vm918, %v913
  %931 = vst.msk [vmem:[%s3 + $0x60] sm:$0xff] %vm918, %v914
  %932 = vst.msk [vmem:[%s3 + $0x68] sm:$0xff] %vm918, %v915
  %933 = vst.msk [vmem:[%s3 + $0x70] sm:$0xff] %vm918, %v916
  %934 = vst.msk [vmem:[%s3 + $0x78] sm:$0xff] %vm918, %v917
  // Predicated region
  $region14: #{tpu_custom_call.1} parent=0 // pred_check
    _
  $region15: #{tpu_custom_call.1} parent=0 // pred_check_branch
    %936 = sbr.rel (0) target = $region17
  $region16: #{tpu_custom_call.1} parent=0 // pred_region
    _
  $region17: #{tpu_custom_call.1} parent=0 // pred_fallthru
    _
  // Predicated region
  $region18: #{tpu_custom_call.1} parent=0 // pred_check
    _
  $region19: #{tpu_custom_call.1} parent=0 // pred_check_branch
    %938 = sbr.rel (0) target = $region21
  $region20: #{tpu_custom_call.1} parent=0 // pred_region
    _
  $region21: #{tpu_custom_call.1} parent=0 // pred_fallthru
    _

</llo_original>
